<compile_context>
chip_gen: v6e
topology: v6e:2x2x1
jax: 0.10.0
libtpu: 0.0.40
codegen_flags: <defaults>
</compile_context>

<pallas_src>
import jax
import jax.numpy as jnp
from jax.experimental import pallas as pl
from jax.experimental.pallas import tpu as pltpu

IN_DIM = 784
H1 = 128
H2 = 64
OUT = 10

# lane-padded sizes used inside the kernel
H2P = 128
OUTP = 128

MAX_TB = 512  # rows per grid step cap (measured ~85% of HBM roofline; v5e-VMEM safe)


def _round_up(x, m):
    return ((x + m - 1) // m) * m


def _choose_batch_tile(n):
    """Rows per grid step.  Multiple of 16 (bf16 output sublane packing).

    - tiny batches: a single 16-row tile
    - n >= 32: ~ceil(n/2) so the grid has >= 2 steps (v7x megacore engages;
      harmless on single-TC v5e/v6e)
    - capped at MAX_TB rows (f32 x-tile ~1.6 MiB, ~6 MiB total double-buffered)
    """
    if n <= 16:
        return 16
    half = -(-n // 2)  # ceil(n / 2)
    return min(_round_up(half, 16), MAX_TB)


def mlp_kernel(x_ref, w1_ref, b1_ref, w2_ref, b2_ref, w3_ref, b3_ref, o_ref):
    # x_ref : [TB, 784]  f32       w1: [784, 128] bf16   b1: [1, 128] f32
    # w2    : [128, 128] bf16 (cols 64..127 zero)        b2: [1, 128] f32 (zero-padded)
    # w3    : [128, 128] bf16 (rows 64.., cols 10.. zero) b3: [1, 128] f32 (zero-padded)
    # o_ref : [TB, 128]  bf16 (only lanes 0..9 meaningful; rest exactly 0)
    x = x_ref[...].astype(jnp.bfloat16)  # in-kernel cast; VPU work hides under DMA
    h1 = jnp.dot(x, w1_ref[...], preferred_element_type=jnp.float32)
    h1 = jnp.maximum(h1 + b1_ref[...], 0.0)

    h2 = jnp.dot(h1.astype(jnp.bfloat16), w2_ref[...],
                 preferred_element_type=jnp.float32)
    h2 = jnp.maximum(h2 + b2_ref[...], 0.0)

    logits = jnp.dot(h2.astype(jnp.bfloat16), w3_ref[...],
                     preferred_element_type=jnp.float32)
    o_ref[...] = (logits + b3_ref[...]).astype(o_ref.dtype)


def net_forward(x_nchw, kernel_params):
    """x_nchw: [N, ...] with prod(trailing dims) == 784. Returns logits [N, 10] (f32)."""
    w1, b1, w2, b2, w3, b3 = kernel_params  # bf16 weights (padded), f32 biases (padded)
    n = x_nchw.shape[0]
    # nn.Flatten(start_dim=1); keep f32 — the bf16 cast happens inside the kernel.
    x2d = x_nchw.reshape(n, -1).astype(jnp.float32)
    assert x2d.shape[1] == IN_DIM, f"expected {IN_DIM} features, got {x2d.shape[1]}"

    tb = _choose_batch_tile(n)
    grid = (pl.cdiv(n, tb),)  # partial edge block: OOB rows read garbage (row-local),
    #                           OOB output rows are masked on store — no jnp.pad pass.

    # Weights/biases: constant index_map -> DMA'd once, resident across batch tiles.
    const = lambda shape: pl.BlockSpec(shape, lambda i: (0,) * len(shape))

    flops = 2 * n * (IN_DIM * H1 + H1 * H2P + H2P * OUTP)
    bytes_accessed = (
        n * IN_DIM * 4                                      # x (f32)
        + (IN_DIM * H1 + H1 * H2P + H2P * OUTP) * 2         # weights (bf16)
        + (H1 + H2P + OUTP) * 4                             # biases (f32)
        + n * OUTP * 2                                      # output (bf16)
    )

    out = pl.pallas_call(
        mlp_kernel,
        out_shape=jax.ShapeDtypeStruct((n, OUTP), jnp.bfloat16),
        grid=grid,
        in_specs=[
            pl.BlockSpec((tb, IN_DIM), lambda i: (i, 0)),  # x: tiled over batch
            const((IN_DIM, H1)),
            const((1, H1)),
            const((H1, H2P)),
            const((1, H2P)),
            const((H2P, OUTP)),
            const((1, OUTP)),
        ],
        out_specs=pl.BlockSpec((tb, OUTP), lambda i: (i, 0)),
        compiler_params=pltpu.CompilerParams(
            dimension_semantics=("parallel",),
        ),
        cost_estimate=pl.CostEstimate(
            flops=flops, transcendentals=0, bytes_accessed=bytes_accessed
        ),
    )(x2d, w1, b1, w2, b2, w3, b3)

    # Small (n,10) slice + upcast; downstream consumers (softmax/argmax/loss) could
    # instead consume the padded bf16 buffer directly so XLA fuses this away.
    return out[:, :OUT].astype(jnp.float32)


def init_params(key):
    """Deterministic init mimicking PyTorch nn.Linear default (U[-1/sqrt(fan_in), +])."""
    def linear_init(k, fan_in, fan_out):
        kw, kb = jax.random.split(k)
        bound = 1.0 / jnp.sqrt(float(fan_in))
        # stored as [in, out] so the kernel does x @ W (== PyTorch x @ W.T)
        w = jax.random.uniform(kw, (fan_in, fan_out), jnp.float32, -bound, bound)
        b = jax.random.uniform(kb, (1, fan_out), jnp.float32, -bound, bound)
        return w, b

    k1, k2, k3 = jax.random.split(key, 3)
    w1, b1 = linear_init(k1, IN_DIM, H1)
    w2, b2 = linear_init(k2, H1, H2)
    w3, b3 = linear_init(k3, H2, OUT)
    return (w1, b1, w2, b2, w3, b3)


def prepare_params(params):
    """Lane-pad the small layers to 128 and cast weights to bf16 for the kernel.

    Padding is exactly zero so it is numerically inert through Linear+ReLU, and the
    padded output lanes (10..127) come out exactly 0 before the wrapper slice."""
    w1, b1, w2, b2, w3, b3 = params
    w2p = jnp.zeros((H1, H2P), jnp.float32).at[:, :H2].set(w2)
    b2p = jnp.zeros((1, H2P), jnp.float32).at[:, :H2].set(b2)
    w3p = jnp.zeros((H2P, OUTP), jnp.float32).at[:H2, :OUT].set(w3)
    b3p = jnp.zeros((1, OUTP), jnp.float32).at[:, :OUT].set(b3)
    return (
        w1.astype(jnp.bfloat16), b1,
        w2p.astype(jnp.bfloat16), b2p,
        w3p.astype(jnp.bfloat16), b3p,
    )


def reference_forward_f32(x_nchw, params):
    """Pure-JAX f32 reference (matches the PyTorch module's math)."""
    w1, b1, w2, b2, w3, b3 = params
    x = x_nchw.reshape(x_nchw.shape[0], -1).astype(jnp.float32)
    h1 = jnp.maximum(x @ w1 + b1, 0.0)
    h2 = jnp.maximum(h1 @ w2 + b2, 0.0)
    return h2 @ w3 + b3


def reference_forward_bf16(x_nchw, params):
    """Pure-JAX reference using the kernel's bf16-input / f32-accumulate scheme."""
    w1, b1, w2, b2, w3, b3 = params
    x = x_nchw.reshape(x_nchw.shape[0], -1).astype(jnp.bfloat16)
    h1 = jnp.dot(x, w1.astype(jnp.bfloat16), preferred_element_type=jnp.float32) + b1
    h1 = jnp.maximum(h1, 0.0)
    h2 = jnp.dot(h1.astype(jnp.bfloat16), w2.astype(jnp.bfloat16),
                 preferred_element_type=jnp.float32) + b2
    h2 = jnp.maximum(h2, 0.0)
    return jnp.dot(h2.astype(jnp.bfloat16), w3.astype(jnp.bfloat16),
                   preferred_element_type=jnp.float32) + b3


if __name__ == "__main__":
    key = jax.random.PRNGKey(0)
    k_x, k_p = jax.random.split(key)

    # Input consistent with a 784-feature flatten: [batch=2, C=1, 28, 28]
    x = jax.random.normal(k_x, (2, 1, 28, 28), dtype=jnp.float32)
    params = init_params(k_p)
    kparams = prepare_params(params)

    logits = net_forward(x, kparams)
    logits = jax.block_until_ready(logits)
    assert logits.shape == (2, 10), logits.shape

    # Tight check: same bf16-in / f32-accumulate scheme, rounded to the kernel's
    # bf16 output precision.
    ref_bf16 = reference_forward_bf16(x, params)
    ref_bf16_r = ref_bf16.astype(jnp.bfloat16).astype(jnp.float32)
    assert jnp.allclose(logits, ref_bf16_r, atol=2e-3, rtol=2e-3), "mismatch vs bf16 reference"

    # Looser check against the pure-f32 module semantics (bf16 quantization noise).
    ref_f32 = reference_forward_f32(x, params)
    assert jnp.allclose(logits, ref_f32, atol=6e-2, rtol=6e-2), "mismatch vs f32 reference"

    print("KERNEL_OK")
</pallas_src>

<mosaic_0001>
module attributes {stable_mosaic.version = 11 : i64} {
  func.func @mlp_kernel(%arg0: i32, %arg1: memref<16x784xf32, #tpu.memory_space<vmem>>, %arg2: memref<784x128xbf16, #tpu.memory_space<vmem>>, %arg3: memref<1x128xf32, #tpu.memory_space<vmem>>, %arg4: memref<128x128xbf16, #tpu.memory_space<vmem>>, %arg5: memref<1x128xf32, #tpu.memory_space<vmem>>, %arg6: memref<128x128xbf16, #tpu.memory_space<vmem>>, %arg7: memref<1x128xf32, #tpu.memory_space<vmem>>, %arg8: memref<16x128xbf16, #tpu.memory_space<vmem>>) attributes {dimension_semantics = [#tpu.dimension_semantics<parallel>], iteration_bounds = array<i64: 1>, scalar_prefetch = 0 : i64, scratch_operands = 0 : i64, tpu.core_type = #tpu.core_type<tc>, window_params = [{transform_indices = @transform_0, window_bounds = array<i64: 16, 784>}, {pipeline_mode = #tpu.pipeline_mode<synchronous>, transform_indices = @transform_1, window_bounds = array<i64: 784, 128>}, {pipeline_mode = #tpu.pipeline_mode<synchronous>, transform_indices = @transform_2, window_bounds = array<i64: 1, 128>}, {pipeline_mode = #tpu.pipeline_mode<synchronous>, transform_indices = @transform_3, window_bounds = array<i64: 128, 128>}, {pipeline_mode = #tpu.pipeline_mode<synchronous>, transform_indices = @transform_4, window_bounds = array<i64: 1, 128>}, {pipeline_mode = #tpu.pipeline_mode<synchronous>, transform_indices = @transform_5, window_bounds = array<i64: 128, 128>}, {pipeline_mode = #tpu.pipeline_mode<synchronous>, transform_indices = @transform_6, window_bounds = array<i64: 1, 128>}, {transform_indices = @transform_7, window_bounds = array<i64: 16, 128>}]} {
    %c0 = arith.constant 0 : index
    %c0_0 = arith.constant 0 : index
    %0 = vector.load %arg1[%c0, %c0_0] : memref<16x784xf32, #tpu.memory_space<vmem>>, vector<16x784xf32>
    %1 = arith.truncf %0 : vector<16x784xf32> to vector<16x784xbf16>
    %c0_1 = arith.constant 0 : index
    %c0_2 = arith.constant 0 : index
    %2 = vector.load %arg2[%c0_1, %c0_2] : memref<784x128xbf16, #tpu.memory_space<vmem>>, vector<784x128xbf16>
    %cst = arith.constant dense<0.000000e+00> : vector<16x128xf32>
    %3 = tpu.matmul %1, %2, %cst {dimension_numbers = #tpu.dot_dimension_numbers<[1], [0], [0], [1], [0, 0, 1, 1], [], []>} : vector<16x784xbf16>, vector<784x128xbf16>, vector<16x128xf32> -> vector<16x128xf32>
    %c0_3 = arith.constant 0 : index
    %c0_4 = arith.constant 0 : index
    %4 = vector.load %arg3[%c0_3, %c0_4] : memref<1x128xf32, #tpu.memory_space<vmem>>, vector<1x128xf32>
    %5 = vector.broadcast %4 : vector<1x128xf32> to vector<16x128xf32>
    %6 = arith.addf %3, %5 : vector<16x128xf32>
    %cst_5 = arith.constant 0.000000e+00 : f32
    %7 = vector.broadcast %cst_5 : f32 to vector<16x128xf32>
    %8 = arith.maximumf %6, %7 : vector<16x128xf32>
    %9 = arith.truncf %8 : vector<16x128xf32> to vector<16x128xbf16>
    %c0_6 = arith.constant 0 : index
    %c0_7 = arith.constant 0 : index
    %10 = vector.load %arg4[%c0_6, %c0_7] : memref<128x128xbf16, #tpu.memory_space<vmem>>, vector<128x128xbf16>
    %cst_8 = arith.constant dense<0.000000e+00> : vector<16x128xf32>
    %11 = tpu.matmul %9, %10, %cst_8 {dimension_numbers = #tpu.dot_dimension_numbers<[1], [0], [0], [1], [0, 0, 1, 1], [], []>} : vector<16x128xbf16>, vector<128x128xbf16>, vector<16x128xf32> -> vector<16x128xf32>
    %c0_9 = arith.constant 0 : index
    %c0_10 = arith.constant 0 : index
    %12 = vector.load %arg5[%c0_9, %c0_10] : memref<1x128xf32, #tpu.memory_space<vmem>>, vector<1x128xf32>
    %13 = vector.broadcast %12 : vector<1x128xf32> to vector<16x128xf32>
    %14 = arith.addf %11, %13 : vector<16x128xf32>
    %cst_11 = arith.constant 0.000000e+00 : f32
    %15 = vector.broadcast %cst_11 : f32 to vector<16x128xf32>
    %16 = arith.maximumf %14, %15 : vector<16x128xf32>
    %17 = arith.truncf %16 : vector<16x128xf32> to vector<16x128xbf16>
    %c0_12 = arith.constant 0 : index
    %c0_13 = arith.constant 0 : index
    %18 = vector.load %arg6[%c0_12, %c0_13] : memref<128x128xbf16, #tpu.memory_space<vmem>>, vector<128x128xbf16>
    %cst_14 = arith.constant dense<0.000000e+00> : vector<16x128xf32>
    %19 = tpu.matmul %17, %18, %cst_14 {dimension_numbers = #tpu.dot_dimension_numbers<[1], [0], [0], [1], [0, 0, 1, 1], [], []>} : vector<16x128xbf16>, vector<128x128xbf16>, vector<16x128xf32> -> vector<16x128xf32>
    %c0_15 = arith.constant 0 : index
    %c0_16 = arith.constant 0 : index
    %20 = vector.load %arg7[%c0_15, %c0_16] : memref<1x128xf32, #tpu.memory_space<vmem>>, vector<1x128xf32>
    %21 = vector.broadcast %20 : vector<1x128xf32> to vector<16x128xf32>
    %22 = arith.addf %19, %21 : vector<16x128xf32>
    %23 = arith.truncf %22 : vector<16x128xf32> to vector<16x128xbf16>
    %c0_17 = arith.constant 0 : index
    %c0_18 = arith.constant 0 : index
    %24 = vector.load %arg8[%c0_17, %c0_18] : memref<16x128xbf16, #tpu.memory_space<vmem>>, vector<16x128xbf16>
    tpu.vector_store %arg8[%c0_17, %c0_18], %23 {strides = array<i32>} : memref<16x128xbf16, #tpu.memory_space<vmem>>, vector<16x128xbf16>,
    return
  }
  func.func @transform_0(%arg0: i32) -> (i32, i32) {
    %c0_i32 = arith.constant 0 : i32
    %c0_i32_0 = arith.constant 0 : i32
    return %arg0, %c0_i32 : i32, i32
  }
  func.func @transform_1(%arg0: i32) -> (i32, i32) {
    %c0_i32 = arith.constant 0 : i32
    %c0_i32_0 = arith.constant 0 : i32
    %c0_i32_1 = arith.constant 0 : i32
    return %c0_i32, %c0_i32_0 : i32, i32
  }
  func.func @transform_2(%arg0: i32) -> (i32, i32) {
    %c0_i32 = arith.constant 0 : i32
    %c0_i32_0 = arith.constant 0 : i32
    %c0_i32_1 = arith.constant 0 : i32
    return %c0_i32, %c0_i32_0 : i32, i32
  }
  func.func @transform_3(%arg0: i32) -> (i32, i32) {
    %c0_i32 = arith.constant 0 : i32
    %c0_i32_0 = arith.constant 0 : i32
    %c0_i32_1 = arith.constant 0 : i32
    return %c0_i32, %c0_i32_0 : i32, i32
  }
  func.func @transform_4(%arg0: i32) -> (i32, i32) {
    %c0_i32 = arith.constant 0 : i32
    %c0_i32_0 = arith.constant 0 : i32
    %c0_i32_1 = arith.constant 0 : i32
    return %c0_i32, %c0_i32_0 : i32, i32
  }
  func.func @transform_5(%arg0: i32) -> (i32, i32) {
    %c0_i32 = arith.constant 0 : i32
    %c0_i32_0 = arith.constant 0 : i32
    %c0_i32_1 = arith.constant 0 : i32
    return %c0_i32, %c0_i32_0 : i32, i32
  }
  func.func @transform_6(%arg0: i32) -> (i32, i32) {
    %c0_i32 = arith.constant 0 : i32
    %c0_i32_0 = arith.constant 0 : i32
    %c0_i32_1 = arith.constant 0 : i32
    return %c0_i32, %c0_i32_0 : i32, i32
  }
  func.func @transform_7(%arg0: i32) -> (i32, i32) {
    %c0_i32 = arith.constant 0 : i32
    %c0_i32_0 = arith.constant 0 : i32
    return %arg0, %c0_i32 : i32, i32
  }
}

</mosaic_0001>

<llo_original>
// kernel: tpu_custom_call.1
$region0: #{tpu_custom_call.1}
  #allocation0 [shape = 'u32[]', space=smem, size = 0x4, offset = 0x4, fixed_abs, tag = 'smem constant byte address 0x4 - core index']
  #allocation1 [shape = 'u32[144,128]{1,0:T(1,128)}', space=vmem, size = 0x12000, scoped, tag = 'internal scratch']
  %s0 = inlined_call_operand.hbm [shape: f32[2,784], index: 0, kind: input, shape index: {}]
  %s1 = inlined_call_operand.hbm [shape: bf16[784,128], index: 1, kind: input, shape index: {}]
  %s2 = inlined_call_operand.vmem [shape: f32[1,128], index: 2, kind: input, shape index: {}]
  %s3 = inlined_call_operand.hbm [shape: bf16[128,128], index: 3, kind: input, shape index: {}]
  %s4 = inlined_call_operand.vmem [shape: f32[1,128], index: 4, kind: input, shape index: {}]
  %s5 = inlined_call_operand.hbm [shape: bf16[128,128], index: 5, kind: input, shape index: {}]
  %s6 = inlined_call_operand.vmem [shape: f32[1,128], index: 6, kind: input, shape index: {}]
  %s7 = inlined_call_operand.hbm [shape: bf16[2,128], index: 7, kind: output, shape index: {}]
  %s8 = sld [smem:[#allocation0]]
  $region54: #{tpu_custom_call.1} parent=0
    _
  %s10 = ssub.s32 1, %s8
  %s11 = scalar_select 0, %s10, %s8
  $region1: #{tpu_custom_call.1} parent=0
    #allocation2 [shape = 'u8[57344]{0}', space=vmem, size = 0xe000, scoped, tag = 'input window, operand 0, single buffered']
    #allocation3 [shape = 's32[1]{0}', space=sflag, size = 0x4, scoped, tag = 'scoped memory for tpu_custom_call.1']
    #allocation4 [shape = 's32[1]{0}', space=sflag, size = 0x4, scoped, tag = 'scoped memory for tpu_custom_call.1']
    #allocation5 [shape = 'u8[200704]{0}', space=vmem, size = 0x31000, scoped, tag = 'input window, operand 1, single buffered']
    #allocation6 [shape = 's32[1]{0}', space=sflag, size = 0x4, scoped, tag = 'scoped memory for tpu_custom_call.1']
    #allocation7 [shape = 'u8[32768]{0}', space=vmem, size = 0x8000, scoped, tag = 'input window, operand 3, single buffered']
    #allocation8 [shape = 'u8[32768]{0}', space=vmem, size = 0x8000, scoped, tag = 'input window, operand 5, single buffered']
    #allocation9 [shape = 's32[1]{0}', space=sflag, size = 0x4, scoped, tag = 'scoped memory for tpu_custom_call.1']
    #allocation10 [shape = 'u8[4096]{0}', space=vmem, size = 0x1000, scoped, tag = 'output window, operand 0, single buffered']
    %12 = vsyncpa [#allocation3], 0
    %13 = vsyncpa [#allocation6], 0
    %14 = vsyncpa [#allocation9], 0
    %15 = vsyncpa [#allocation4], 0
    // Predicated region
    $region2: #{tpu_custom_call.1} parent=1 // pred_check
      _
    $region3: #{tpu_custom_call.1} parent=1 // pred_check_branch
      %17 = sbr.rel (0) target = $region5
    $region4: #{tpu_custom_call.1} parent=1 // pred_region
      %s19 = ssub.s32 1792, 224
      %20 = vsyncadd [#allocation3], %s19
      %s21 = sshll.u32 [#allocation2], 4
      %s22 = int_to_ptr.vmem [resolvable:$true] %s21
      %27 = dma.hbm_to_vmem [thread:$0]  %s0, 224, %s22, [#allocation3], 224, 224, 14
    $region5: #{tpu_custom_call.1} parent=1 // pred_fallthru
      _
    // Predicated region
    $region6: #{tpu_custom_call.1} parent=1 // pred_check
      _
    $region7: #{tpu_custom_call.1} parent=1 // pred_check_branch
      %29 = sbr.rel (0) target = $region9
    $region8: #{tpu_custom_call.1} parent=1 // pred_region
      %s31 = ssub.s32 6272, 6272
      %32 = vsyncadd [#allocation6], %s31
      %s33 = sshll.u32 [#allocation5], 4
      %s34 = int_to_ptr.vmem [resolvable:$true] %s33
      %39 = dma.hbm_to_vmem [thread:$0]  %s1, 6272, %s34, [#allocation6], 64, 64, 4
    $region9: #{tpu_custom_call.1} parent=1 // pred_fallthru
      _
    // Predicated region
    $region10: #{tpu_custom_call.1} parent=1 // pred_check
      _
    $region11: #{tpu_custom_call.1} parent=1 // pred_check_branch
      %41 = sbr.rel (0) target = $region13
    $region12: #{tpu_custom_call.1} parent=1 // pred_region
      _
    $region13: #{tpu_custom_call.1} parent=1 // pred_fallthru
      _
    // Predicated region
    $region14: #{tpu_custom_call.1} parent=1 // pred_check
      _
    $region15: #{tpu_custom_call.1} parent=1 // pred_check_branch
      %43 = sbr.rel (0) target = $region17
    $region16: #{tpu_custom_call.1} parent=1 // pred_region
      %s45 = ssub.s32 1024, 1024
      %46 = vsyncadd [#allocation6], %s45
      %s47 = sshll.u32 [#allocation7], 4
      %s48 = int_to_ptr.vmem [resolvable:$true] %s47
      %53 = dma.hbm_to_vmem [thread:$0]  %s3, 1024, %s48, [#allocation6], 64, 64, 4
    $region17: #{tpu_custom_call.1} parent=1 // pred_fallthru
      _
    // Predicated region
    $region18: #{tpu_custom_call.1} parent=1 // pred_check
      _
    $region19: #{tpu_custom_call.1} parent=1 // pred_check_branch
      %55 = sbr.rel (0) target = $region21
    $region20: #{tpu_custom_call.1} parent=1 // pred_region
      _
    $region21: #{tpu_custom_call.1} parent=1 // pred_fallthru
      _
    // Predicated region
    $region22: #{tpu_custom_call.1} parent=1 // pred_check
      _
    $region23: #{tpu_custom_call.1} parent=1 // pred_check_branch
      %57 = sbr.rel (0) target = $region25
    $region24: #{tpu_custom_call.1} parent=1 // pred_region
      %s59 = ssub.s32 1024, 1024
      %60 = vsyncadd [#allocation9], %s59
      %s61 = sshll.u32 [#allocation8], 4
      %s62 = int_to_ptr.vmem [resolvable:$true] %s61
      %67 = dma.hbm_to_vmem [thread:$0]  %s5, 1024, %s62, [#allocation9], 64, 64, 4
    $region25: #{tpu_custom_call.1} parent=1 // pred_fallthru
      _
    // Predicated region
    $region26: #{tpu_custom_call.1} parent=1 // pred_check
      _
    $region27: #{tpu_custom_call.1} parent=1 // pred_check_branch
      %69 = sbr.rel (0) target = $region29
    $region28: #{tpu_custom_call.1} parent=1 // pred_region
      _
    $region29: #{tpu_custom_call.1} parent=1 // pred_fallthru
      _
    // Predicated region
    $region30: #{tpu_custom_call.1} parent=1 // pred_check
      _
    $region31: #{tpu_custom_call.1} parent=1 // pred_check_branch
      %71 = sbr.rel (0) target = $region33
    $region32: #{tpu_custom_call.1} parent=1 // pred_region
      %72 = dma.done [#allocation3], 1792
    $region33: #{tpu_custom_call.1} parent=1 // pred_fallthru
      _
    // Predicated region
    $region34: #{tpu_custom_call.1} parent=1 // pred_check
      _
    $region35: #{tpu_custom_call.1} parent=1 // pred_check_branch
      %74 = sbr.rel (0) target = $region37
    $region36: #{tpu_custom_call.1} parent=1 // pred_region
      %75 = dma.done [#allocation6], 6272
    $region37: #{tpu_custom_call.1} parent=1 // pred_fallthru
      _
    // Predicated region
    $region38: #{tpu_custom_call.1} parent=1 // pred_check
      _
    $region39: #{tpu_custom_call.1} parent=1 // pred_check_branch
      %77 = sbr.rel (0) target = $region41
    $region40: #{tpu_custom_call.1} parent=1 // pred_region
      %78 = dma.done [#allocation6], 1024
    $region41: #{tpu_custom_call.1} parent=1 // pred_fallthru
      _
    // Predicated region
    $region42: #{tpu_custom_call.1} parent=1 // pred_check
      _
    $region43: #{tpu_custom_call.1} parent=1 // pred_check_branch
      %80 = sbr.rel (0) target = $region45
    $region44: #{tpu_custom_call.1} parent=1 // pred_region
      %81 = dma.done [#allocation9], 1024
    $region45: #{tpu_custom_call.1} parent=1 // pred_fallthru
      _
    %v83 = vld [vmem:[#allocation2] sm:$0xff]
    %v84 = vld [vmem:[#allocation2 + $0x8] sm:$0x3f]
    %v85 = vld [vmem:[#allocation2 + $0xe] sm:$0xff]
    %v86 = vld [vmem:[#allocation2 + $0x16] sm:$0x3f]
    %v87 = vld [vmem:[#allocation2 + $0x1c] sm:$0xff]
    %v88 = vld [vmem:[#allocation2 + $0x24] sm:$0x3f]
    %v89 = vld [vmem:[#allocation2 + $0x2a] sm:$0xff]
    %v90 = vld [vmem:[#allocation2 + $0x32] sm:$0x3f]
    %v91 = vld [vmem:[#allocation2 + $0x38] sm:$0xff]
    %v92 = vld [vmem:[#allocation2 + $0x40] sm:$0x3f]
    %v93 = vld [vmem:[#allocation2 + $0x46] sm:$0xff]
    %v94 = vld [vmem:[#allocation2 + $0x4e] sm:$0x3f]
    %v95 = vld [vmem:[#allocation2 + $0x54] sm:$0xff]
    %v96 = vld [vmem:[#allocation2 + $0x5c] sm:$0x3f]
    %v97 = vld [vmem:[#allocation2 + $0x62] sm:$0xff]
    %v98 = vld [vmem:[#allocation2 + $0x6a] sm:$0x3f]
    %v115 = vcombine.low %v83, %v85
    %v116 = vcombine.high %v83, %v85
    %v117 = vcombine.low %v87, %v89
    %v118 = vcombine.high %v87, %v89
    %v120 = vunpack.c.l.s4 1983009808
    %v121 = vunpack.c.0.s8 %v120
    %v122 = vlaneseq
    %v123 = vshrl.u32 %v122, 7
    %v124 = vsub.s32 %v121, %v123
    %v125 = vrot.slane %v115, %v124
    %v127 = vunpack.c.l.s4 1983009808
    %v128 = vunpack.c.0.s8 %v127
    %v129 = vlaneseq
    %v130 = vshrl.u32 %v129, 7
    %v131 = vsub.s32 %v128, %v130
    %v132 = vrot.slane %v116, %v131
    %v134 = vunpack.c.l.s4 1983009808
    %v135 = vunpack.c.0.s8 %v134
    %v136 = vlaneseq
    %v137 = vshrl.u32 %v136, 7
    %v138 = vsub.s32 %v135, %v137
    %v139 = vrot.slane %v117, %v138
    %v141 = vunpack.c.l.s4 1983009808
    %v142 = vunpack.c.0.s8 %v141
    %v143 = vlaneseq
    %v144 = vshrl.u32 %v143, 7
    %v145 = vsub.s32 %v142, %v144
    %v146 = vrot.slane %v118, %v145
    %v147 = vcombine.low %v125, %v139
    %v148 = vcombine.high %v125, %v139
    %v149 = vcombine.low %v132, %v146
    %v150 = vcombine.high %v132, %v146
    %v151 = vcombine.low %v84, %v86
    %v152 = vcombine.high %v84, %v86
    %v153 = vcombine.low %v88, %v90
    %v154 = vcombine.high %v88, %v90
    %v156 = vunpack.c.l.s4 1983009808
    %v157 = vunpack.c.0.s8 %v156
    %v158 = vlaneseq
    %v159 = vshrl.u32 %v158, 7
    %v160 = vsub.s32 %v157, %v159
    %v161 = vrot.slane %v151, %v160
    %v163 = vunpack.c.l.s4 1983009808
    %v164 = vunpack.c.0.s8 %v163
    %v165 = vlaneseq
    %v166 = vshrl.u32 %v165, 7
    %v167 = vsub.s32 %v164, %v166
    %v168 = vrot.slane %v152, %v167
    %v170 = vunpack.c.l.s4 1983009808
    %v171 = vunpack.c.0.s8 %v170
    %v172 = vlaneseq
    %v173 = vshrl.u32 %v172, 7
    %v174 = vsub.s32 %v171, %v173
    %v175 = vrot.slane %v153, %v174
    %v177 = vunpack.c.l.s4 1983009808
    %v178 = vunpack.c.0.s8 %v177
    %v179 = vlaneseq
    %v180 = vshrl.u32 %v179, 7
    %v181 = vsub.s32 %v178, %v180
    %v182 = vrot.slane %v154, %v181
    %v183 = vcombine.low %v161, %v175
    %v184 = vcombine.high %v161, %v175
    %v185 = vcombine.low %v168, %v182
    %v186 = vcombine.low %v91, %v93
    %v187 = vcombine.high %v91, %v93
    %v188 = vcombine.low %v95, %v97
    %v189 = vcombine.high %v95, %v97
    %v191 = vunpack.c.l.s4 1983009808
    %v192 = vunpack.c.0.s8 %v191
    %v193 = vlaneseq
    %v194 = vshrl.u32 %v193, 7
    %v195 = vsub.s32 %v192, %v194
    %v196 = vrot.slane %v186, %v195
    %v198 = vunpack.c.l.s4 1983009808
    %v199 = vunpack.c.0.s8 %v198
    %v200 = vlaneseq
    %v201 = vshrl.u32 %v200, 7
    %v202 = vsub.s32 %v199, %v201
    %v203 = vrot.slane %v187, %v202
    %v205 = vunpack.c.l.s4 1983009808
    %v206 = vunpack.c.0.s8 %v205
    %v207 = vlaneseq
    %v208 = vshrl.u32 %v207, 7
    %v209 = vsub.s32 %v206, %v208
    %v210 = vrot.slane %v188, %v209
    %v212 = vunpack.c.l.s4 1983009808
    %v213 = vunpack.c.0.s8 %v212
    %v214 = vlaneseq
    %v215 = vshrl.u32 %v214, 7
    %v216 = vsub.s32 %v213, %v215
    %v217 = vrot.slane %v189, %v216
    %v218 = vcombine.low %v196, %v210
    %v219 = vcombine.high %v196, %v210
    %v220 = vcombine.low %v203, %v217
    %v221 = vcombine.high %v203, %v217
    %v222 = vcombine.low %v92, %v94
    %v223 = vcombine.high %v92, %v94
    %v224 = vcombine.low %v96, %v98
    %v225 = vcombine.high %v96, %v98
    %v227 = vunpack.c.l.s4 1983009808
    %v228 = vunpack.c.0.s8 %v227
    %v229 = vlaneseq
    %v230 = vshrl.u32 %v229, 7
    %v231 = vsub.s32 %v228, %v230
    %v232 = vrot.slane %v222, %v231
    %v234 = vunpack.c.l.s4 1983009808
    %v235 = vunpack.c.0.s8 %v234
    %v236 = vlaneseq
    %v237 = vshrl.u32 %v236, 7
    %v238 = vsub.s32 %v235, %v237
    %v239 = vrot.slane %v223, %v238
    %v241 = vunpack.c.l.s4 1983009808
    %v242 = vunpack.c.0.s8 %v241
    %v243 = vlaneseq
    %v244 = vshrl.u32 %v243, 7
    %v245 = vsub.s32 %v242, %v244
    %v246 = vrot.slane %v224, %v245
    %v248 = vunpack.c.l.s4 1983009808
    %v249 = vunpack.c.0.s8 %v248
    %v250 = vlaneseq
    %v251 = vshrl.u32 %v250, 7
    %v252 = vsub.s32 %v249, %v251
    %v253 = vrot.slane %v225, %v252
    %v254 = vcombine.low %v232, %v246
    %v255 = vcombine.high %v232, %v246
    %v256 = vcombine.low %v239, %v253
    %v271 = vpack.c.bf16 %v218, %v147
    %v272 = vpack.c.bf16 %v219, %v148
    %v273 = vpack.c.bf16 %v220, %v149
    %v274 = vpack.c.bf16 %v221, %v150
    %v275 = vpack.c.bf16 %v254, %v183
    %v276 = vpack.c.bf16 %v255, %v184
    %v277 = vpack.c.bf16 %v256, %v185
    %v278 = vld [vmem:[#allocation5] sm:$0xf]
    %v279 = vld [vmem:[#allocation5 + $0x4] sm:$0xf]
    %v280 = vld [vmem:[#allocation5 + $0x8] sm:$0xf]
    %v281 = vld [vmem:[#allocation5 + $0xc] sm:$0xf]
    %v282 = vld [vmem:[#allocation5 + $0x10] sm:$0xf]
    %v283 = vld [vmem:[#allocation5 + $0x14] sm:$0xf]
    %v284 = vld [vmem:[#allocation5 + $0x18] sm:$0xf]
    %v285 = vld [vmem:[#allocation5 + $0x1c] sm:$0xf]
    %v286 = vld [vmem:[#allocation5 + $0x20] sm:$0xf]
    %v287 = vld [vmem:[#allocation5 + $0x24] sm:$0xf]
    %v288 = vld [vmem:[#allocation5 + $0x28] sm:$0xf]
    %v289 = vld [vmem:[#allocation5 + $0x2c] sm:$0xf]
    %v290 = vld [vmem:[#allocation5 + $0x30] sm:$0xf]
    %v291 = vld [vmem:[#allocation5 + $0x34] sm:$0xf]
    %v292 = vld [vmem:[#allocation5 + $0x38] sm:$0xf]
    %v293 = vld [vmem:[#allocation5 + $0x3c] sm:$0xf]
    %v294 = vld [vmem:[#allocation5 + $0x40] sm:$0xf]
    %v295 = vld [vmem:[#allocation5 + $0x44] sm:$0xf]
    %v296 = vld [vmem:[#allocation5 + $0x48] sm:$0xf]
    %v297 = vld [vmem:[#allocation5 + $0x4c] sm:$0xf]
    %v298 = vld [vmem:[#allocation5 + $0x50] sm:$0xf]
    %v299 = vld [vmem:[#allocation5 + $0x54] sm:$0xf]
    %v300 = vld [vmem:[#allocation5 + $0x58] sm:$0xf]
    %v301 = vld [vmem:[#allocation5 + $0x5c] sm:$0xf]
    %v302 = vld [vmem:[#allocation5 + $0x60] sm:$0xf]
    %v303 = vld [vmem:[#allocation5 + $0x64] sm:$0xf]
    %v304 = vld [vmem:[#allocation5 + $0x68] sm:$0xf]
    %v305 = vld [vmem:[#allocation5 + $0x6c] sm:$0xf]
    %v306 = vld [vmem:[#allocation5 + $0x70] sm:$0xf]
    %v307 = vld [vmem:[#allocation5 + $0x74] sm:$0xf]
    %v308 = vld [vmem:[#allocation5 + $0x78] sm:$0xf]
    %v309 = vld [vmem:[#allocation5 + $0x7c] sm:$0xf]
    %v310 = vld [vmem:[#allocation5 + $0x80] sm:$0xf]
    %v311 = vld [vmem:[#allocation5 + $0x84] sm:$0xf]
    %v312 = vld [vmem:[#allocation5 + $0x88] sm:$0xf]
    %v313 = vld [vmem:[#allocation5 + $0x8c] sm:$0xf]
    %v314 = vld [vmem:[#allocation5 + $0x90] sm:$0xf]
    %v315 = vld [vmem:[#allocation5 + $0x94] sm:$0xf]
    %v316 = vld [vmem:[#allocation5 + $0x98] sm:$0xf]
    %v317 = vld [vmem:[#allocation5 + $0x9c] sm:$0xf]
    %v318 = vld [vmem:[#allocation5 + $0xa0] sm:$0xf]
    %v319 = vld [vmem:[#allocation5 + $0xa4] sm:$0xf]
    %v320 = vld [vmem:[#allocation5 + $0xa8] sm:$0xf]
    %v321 = vld [vmem:[#allocation5 + $0xac] sm:$0xf]
    %v322 = vld [vmem:[#allocation5 + $0xb0] sm:$0xf]
    %v323 = vld [vmem:[#allocation5 + $0xb4] sm:$0xf]
    %v324 = vld [vmem:[#allocation5 + $0xb8] sm:$0xf]
    %v325 = vld [vmem:[#allocation5 + $0xbc] sm:$0xf]
    %v326 = vld [vmem:[#allocation5 + $0xc0] sm:$0xf]
    %v327 = vld [vmem:[#allocation5 + $0xc4] sm:$0xf]
    %v328 = vld [vmem:[#allocation5 + $0xc8] sm:$0xf]
    %v329 = vld [vmem:[#allocation5 + $0xcc] sm:$0xf]
    %v330 = vld [vmem:[#allocation5 + $0xd0] sm:$0xf]
    %v331 = vld [vmem:[#allocation5 + $0xd4] sm:$0xf]
    %v332 = vld [vmem:[#allocation5 + $0xd8] sm:$0xf]
    %v333 = vld [vmem:[#allocation5 + $0xdc] sm:$0xf]
    %v334 = vld [vmem:[#allocation5 + $0xe0] sm:$0xf]
    %v335 = vld [vmem:[#allocation5 + $0xe4] sm:$0xf]
    %v336 = vld [vmem:[#allocation5 + $0xe8] sm:$0xf]
    %v337 = vld [vmem:[#allocation5 + $0xec] sm:$0xf]
    %v338 = vld [vmem:[#allocation5 + $0xf0] sm:$0xf]
    %v339 = vld [vmem:[#allocation5 + $0xf4] sm:$0xf]
    %v340 = vld [vmem:[#allocation5 + $0xf8] sm:$0xf]
    %v341 = vld [vmem:[#allocation5 + $0xfc] sm:$0xf]
    %v342 = vld [vmem:[#allocation5 + $0x100] sm:$0xf]
    %v343 = vld [vmem:[#allocation5 + $0x104] sm:$0xf]
    %v344 = vld [vmem:[#allocation5 + $0x108] sm:$0xf]
    %v345 = vld [vmem:[#allocation5 + $0x10c] sm:$0xf]
    %v346 = vld [vmem:[#allocation5 + $0x110] sm:$0xf]
    %v347 = vld [vmem:[#allocation5 + $0x114] sm:$0xf]
    %v348 = vld [vmem:[#allocation5 + $0x118] sm:$0xf]
    %v349 = vld [vmem:[#allocation5 + $0x11c] sm:$0xf]
    %v350 = vld [vmem:[#allocation5 + $0x120] sm:$0xf]
    %v351 = vld [vmem:[#allocation5 + $0x124] sm:$0xf]
    %v352 = vld [vmem:[#allocation5 + $0x128] sm:$0xf]
    %v353 = vld [vmem:[#allocation5 + $0x12c] sm:$0xf]
    %v354 = vld [vmem:[#allocation5 + $0x130] sm:$0xf]
    %v355 = vld [vmem:[#allocation5 + $0x134] sm:$0xf]
    %v356 = vld [vmem:[#allocation5 + $0x138] sm:$0xf]
    %v357 = vld [vmem:[#allocation5 + $0x13c] sm:$0xf]
    %v358 = vld [vmem:[#allocation5 + $0x140] sm:$0xf]
    %v359 = vld [vmem:[#allocation5 + $0x144] sm:$0xf]
    %v360 = vld [vmem:[#allocation5 + $0x148] sm:$0xf]
    %v361 = vld [vmem:[#allocation5 + $0x14c] sm:$0xf]
    %v362 = vld [vmem:[#allocation5 + $0x150] sm:$0xf]
    %v363 = vld [vmem:[#allocation5 + $0x154] sm:$0xf]
    %v364 = vld [vmem:[#allocation5 + $0x158] sm:$0xf]
    %v365 = vld [vmem:[#allocation5 + $0x15c] sm:$0xf]
    %v366 = vld [vmem:[#allocation5 + $0x160] sm:$0xf]
    %v367 = vld [vmem:[#allocation5 + $0x164] sm:$0xf]
    %v368 = vld [vmem:[#allocation5 + $0x168] sm:$0xf]
    %v369 = vld [vmem:[#allocation5 + $0x16c] sm:$0xf]
    %v370 = vld [vmem:[#allocation5 + $0x170] sm:$0xf]
    %v371 = vld [vmem:[#allocation5 + $0x174] sm:$0xf]
    %v372 = vld [vmem:[#allocation5 + $0x178] sm:$0xf]
    %v373 = vld [vmem:[#allocation5 + $0x17c] sm:$0xf]
    %v374 = vld [vmem:[#allocation5 + $0x180] sm:$0xf]
    %v375 = vld [vmem:[#allocation5 + $0x184] sm:$0xf]
    %v376 = vld [vmem:[%s2] sm:$0x1]
    %v378 = vlaneseq
    %v379 = vshrl.u32 %v378, 7
    %v380 = vsub.s32 0, %v379
    %v381 = vrot.slane %v376, %v380
    %v481 = vunpack.c.l.b16 %v278
    %v482 = vunpack.c.l.b16 %v279
    %v483 = vunpack.c.l.b16 %v280
    %v484 = vunpack.c.l.b16 %v281
    %v485 = vunpack.c.l.b16 %v282
    %v486 = vunpack.c.l.b16 %v283
    %v487 = vunpack.c.l.b16 %v284
    %v488 = vunpack.c.l.b16 %v285
    %v489 = vunpack.c.l.b16 %v286
    %v490 = vunpack.c.l.b16 %v287
    %v491 = vunpack.c.l.b16 %v288
    %v492 = vunpack.c.l.b16 %v289
    %v493 = vunpack.c.l.b16 %v290
    %v494 = vunpack.c.l.b16 %v291
    %v495 = vunpack.c.l.b16 %v292
    %v496 = vunpack.c.l.b16 %v293
    %v497 = vunpack.c.l.b16 %v294
    %v498 = vunpack.c.l.b16 %v295
    %v499 = vunpack.c.l.b16 %v296
    %v500 = vunpack.c.l.b16 %v297
    %v501 = vunpack.c.l.b16 %v298
    %v502 = vunpack.c.l.b16 %v299
    %v503 = vunpack.c.l.b16 %v300
    %v504 = vunpack.c.l.b16 %v301
    %v505 = vunpack.c.l.b16 %v302
    %v506 = vunpack.c.l.b16 %v303
    %v507 = vunpack.c.l.b16 %v304
    %v508 = vunpack.c.l.b16 %v305
    %v509 = vunpack.c.l.b16 %v306
    %v510 = vunpack.c.l.b16 %v307
    %v511 = vunpack.c.l.b16 %v308
    %v512 = vunpack.c.l.b16 %v309
    %v513 = vunpack.c.l.b16 %v310
    %v514 = vunpack.c.l.b16 %v311
    %v515 = vunpack.c.l.b16 %v312
    %v516 = vunpack.c.l.b16 %v313
    %v517 = vunpack.c.l.b16 %v314
    %v518 = vunpack.c.l.b16 %v315
    %v519 = vunpack.c.l.b16 %v316
    %v520 = vunpack.c.l.b16 %v317
    %v521 = vunpack.c.l.b16 %v318
    %v522 = vunpack.c.l.b16 %v319
    %v523 = vunpack.c.l.b16 %v320
    %v524 = vunpack.c.l.b16 %v321
    %v525 = vunpack.c.l.b16 %v322
    %v526 = vunpack.c.l.b16 %v323
    %v527 = vunpack.c.l.b16 %v324
    %v528 = vunpack.c.l.b16 %v325
    %v529 = vunpack.c.l.b16 %v326
    %v530 = vunpack.c.l.b16 %v327
    %v531 = vunpack.c.l.b16 %v328
    %v532 = vunpack.c.l.b16 %v329
    %v533 = vunpack.c.l.b16 %v330
    %v534 = vunpack.c.l.b16 %v331
    %v535 = vunpack.c.l.b16 %v332
    %v536 = vunpack.c.l.b16 %v333
    %v537 = vunpack.c.l.b16 %v334
    %v538 = vunpack.c.l.b16 %v335
    %v539 = vunpack.c.l.b16 %v336
    %v540 = vunpack.c.l.b16 %v337
    %v541 = vunpack.c.l.b16 %v338
    %v542 = vunpack.c.l.b16 %v339
    %v543 = vunpack.c.l.b16 %v340
    %v544 = vunpack.c.l.b16 %v341
    %v545 = vunpack.c.l.b16 %v342
    %v546 = vunpack.c.l.b16 %v343
    %v547 = vunpack.c.l.b16 %v344
    %v548 = vunpack.c.l.b16 %v345
    %v549 = vunpack.c.l.b16 %v346
    %v550 = vunpack.c.l.b16 %v347
    %v551 = vunpack.c.l.b16 %v348
    %v552 = vunpack.c.l.b16 %v349
    %v553 = vunpack.c.l.b16 %v350
    %v554 = vunpack.c.l.b16 %v351
    %v555 = vunpack.c.l.b16 %v352
    %v556 = vunpack.c.l.b16 %v353
    %v557 = vunpack.c.l.b16 %v354
    %v558 = vunpack.c.l.b16 %v355
    %v559 = vunpack.c.l.b16 %v356
    %v560 = vunpack.c.l.b16 %v357
    %v561 = vunpack.c.l.b16 %v358
    %v562 = vunpack.c.l.b16 %v359
    %v563 = vunpack.c.l.b16 %v360
    %v564 = vunpack.c.l.b16 %v361
    %v565 = vunpack.c.l.b16 %v362
    %v566 = vunpack.c.l.b16 %v363
    %v567 = vunpack.c.l.b16 %v364
    %v568 = vunpack.c.l.b16 %v365
    %v569 = vunpack.c.l.b16 %v366
    %v570 = vunpack.c.l.b16 %v367
    %v571 = vunpack.c.l.b16 %v368
    %v572 = vunpack.c.l.b16 %v369
    %v573 = vunpack.c.l.b16 %v370
    %v574 = vunpack.c.l.b16 %v371
    %v575 = vunpack.c.l.b16 %v372
    %v576 = vunpack.c.l.b16 %v373
    %v577 = vunpack.c.l.b16 %v374
    %v578 = vunpack.c.l.b16 %v375
    %v579 = vpack.c.b16 %v482, %v481
    %v580 = vpack.c.b16 %v484, %v483
    %v581 = vpack.c.b16 %v486, %v485
    %v582 = vpack.c.b16 %v488, %v487
    %v583 = vpack.c.b16 %v490, %v489
    %v584 = vpack.c.b16 %v492, %v491
    %v585 = vpack.c.b16 %v494, %v493
    %v586 = vpack.c.b16 %v496, %v495
    %v587 = vpack.c.b16 %v498, %v497
    %v588 = vpack.c.b16 %v500, %v499
    %v589 = vpack.c.b16 %v502, %v501
    %v590 = vpack.c.b16 %v504, %v503
    %v591 = vpack.c.b16 %v506, %v505
    %v592 = vpack.c.b16 %v508, %v507
    %v593 = vpack.c.b16 %v510, %v509
    %v594 = vpack.c.b16 %v512, %v511
    %v595 = vpack.c.b16 %v514, %v513
    %v596 = vpack.c.b16 %v516, %v515
    %v597 = vpack.c.b16 %v518, %v517
    %v598 = vpack.c.b16 %v520, %v519
    %v599 = vpack.c.b16 %v522, %v521
    %v600 = vpack.c.b16 %v524, %v523
    %v601 = vpack.c.b16 %v526, %v525
    %v602 = vpack.c.b16 %v528, %v527
    %v603 = vpack.c.b16 %v530, %v529
    %v604 = vpack.c.b16 %v532, %v531
    %v605 = vpack.c.b16 %v534, %v533
    %v606 = vpack.c.b16 %v536, %v535
    %v607 = vpack.c.b16 %v538, %v537
    %v608 = vpack.c.b16 %v540, %v539
    %v609 = vpack.c.b16 %v542, %v541
    %v610 = vpack.c.b16 %v544, %v543
    %v611 = vpack.c.b16 %v546, %v545
    %v612 = vpack.c.b16 %v548, %v547
    %v613 = vpack.c.b16 %v550, %v549
    %v614 = vpack.c.b16 %v552, %v551
    %v615 = vpack.c.b16 %v554, %v553
    %v616 = vpack.c.b16 %v556, %v555
    %v617 = vpack.c.b16 %v558, %v557
    %v618 = vpack.c.b16 %v560, %v559
    %v619 = vpack.c.b16 %v562, %v561
    %v620 = vpack.c.b16 %v564, %v563
    %v621 = vpack.c.b16 %v566, %v565
    %v622 = vpack.c.b16 %v568, %v567
    %v623 = vpack.c.b16 %v570, %v569
    %v624 = vpack.c.b16 %v572, %v571
    %v625 = vpack.c.b16 %v574, %v573
    %v626 = vpack.c.b16 %v576, %v575
    %v627 = vpack.c.b16 %v578, %v577
    %vm677 = vcmask 130048
    %v679 = vsel %vm677, %v277, 0
    %681 = vmatprep.subr.bf16.mxu0 0
    %682 = vmatpush1.bf16.msra.mxu0 %v586
    %683 = vmatprep.subr.bf16.mxu0 0
    %684 = vmatpush1.bf16.msra.mxu0 %v585
    %685 = vmatprep.subr.bf16.mxu0 0
    %686 = vmatpush1.bf16.msra.mxu0 %v584
    %687 = vmatprep.subr.bf16.mxu0 0
    %688 = vmatpush1.bf16.msra.mxu0 %v583
    %689 = vmatprep.subr.bf16.mxu0 0
    %690 = vmatpush1.bf16.msra.mxu0 %v582
    %691 = vmatprep.subr.bf16.mxu0 0
    %692 = vmatpush1.bf16.msra.mxu0 %v581
    %693 = vmatprep.subr.bf16.mxu0 0
    %694 = vmatpush1.bf16.msra.mxu0 %v580
    %695 = vmatprep.subr.bf16.mxu0 0
    %696 = vmatpush1.bf16.msra.mxu0 %v579
    %697 = vmatprep.subr.bf16.mxu0 0
    %698 = vmatpush2.bf16.msra.mxu0 %v594
    %699 = vmatprep.subr.bf16.mxu0 0
    %700 = vmatpush2.bf16.msra.mxu0 %v593
    %701 = vmatprep.subr.bf16.mxu0 0
    %702 = vmatpush2.bf16.msra.mxu0 %v592
    %703 = vmatprep.subr.bf16.mxu0 0
    %704 = vmatpush2.bf16.msra.mxu0 %v591
    %705 = vmatprep.subr.bf16.mxu0 0
    %706 = vmatpush2.bf16.msra.mxu0 %v590
    %707 = vmatprep.subr.bf16.mxu0 0
    %708 = vmatpush2.bf16.msra.mxu0 %v589
    %709 = vmatprep.subr.bf16.mxu0 0
    %710 = vmatpush2.bf16.msra.mxu0 %v588
    %711 = vmatprep.subr.bf16.mxu0 0
    %712 = vmatpush2.bf16.msra.mxu0 %v587
    %713 = vmatprep.mubr.bf16.mxu0 %v272
    %714 = vmatmul.mubr.bf16.gmra.mxu0 %v271
    %v715 = vpop.f32.mrf.mxu0
    %v716 = vadd.f32 %v381, %v715
    %v717 = vpop.f32.mrf.mxu0
    %v718 = vpop.f32.mrf.mxu0
    %v719 = vadd.f32 %v381, %v718
    %v720 = vpop.f32.mrf.mxu0
    %721 = vdwg.mxu0
    %722 = vmatprep.subr.bf16.mxu0 0
    %723 = vmatpush1.bf16.msra.mxu0 %v602
    %724 = vmatprep.subr.bf16.mxu0 0
    %725 = vmatpush1.bf16.msra.mxu0 %v601
    %726 = vmatprep.subr.bf16.mxu0 0
    %727 = vmatpush1.bf16.msra.mxu0 %v600
    %728 = vmatprep.subr.bf16.mxu0 0
    %729 = vmatpush1.bf16.msra.mxu0 %v599
    %730 = vmatprep.subr.bf16.mxu0 0
    %731 = vmatpush1.bf16.msra.mxu0 %v598
    %732 = vmatprep.subr.bf16.mxu0 0
    %733 = vmatpush1.bf16.msra.mxu0 %v597
    %734 = vmatprep.subr.bf16.mxu0 0
    %735 = vmatpush1.bf16.msra.mxu0 %v596
    %736 = vmatprep.subr.bf16.mxu0 0
    %737 = vmatpush1.bf16.msra.mxu0 %v595
    %738 = vmatprep.subr.bf16.mxu0 0
    %739 = vmatpush2.bf16.msra.mxu0 %v610
    %740 = vmatprep.subr.bf16.mxu0 0
    %741 = vmatpush2.bf16.msra.mxu0 %v609
    %742 = vmatprep.subr.bf16.mxu0 0
    %743 = vmatpush2.bf16.msra.mxu0 %v608
    %744 = vmatprep.subr.bf16.mxu0 0
    %745 = vmatpush2.bf16.msra.mxu0 %v607
    %746 = vmatprep.subr.bf16.mxu0 0
    %747 = vmatpush2.bf16.msra.mxu0 %v606
    %748 = vmatprep.subr.bf16.mxu0 0
    %749 = vmatpush2.bf16.msra.mxu0 %v605
    %750 = vmatprep.subr.bf16.mxu0 0
    %751 = vmatpush2.bf16.msra.mxu0 %v604
    %752 = vmatprep.subr.bf16.mxu0 0
    %753 = vmatpush2.bf16.msra.mxu0 %v603
    %754 = vmatprep.mubr.bf16.mxu0 %v274
    %755 = vmatmul.mubr.bf16.gmra.mxu0 %v273
    %v756 = vpop.f32.mrf.mxu0
    %v757 = vadd.f32 %v716, %v756
    %v758 = vpop.f32.mrf.mxu0
    %v759 = vpop.f32.mrf.mxu0
    %v760 = vadd.f32 %v719, %v759
    %v761 = vpop.f32.mrf.mxu0
    %762 = vdwg.mxu0
    %763 = vmatprep.subr.bf16.mxu0 0
    %764 = vmatpush1.bf16.msra.mxu0 %v618
    %765 = vmatprep.subr.bf16.mxu0 0
    %766 = vmatpush1.bf16.msra.mxu0 %v617
    %767 = vmatprep.subr.bf16.mxu0 0
    %768 = vmatpush1.bf16.msra.mxu0 %v616
    %769 = vmatprep.subr.bf16.mxu0 0
    %770 = vmatpush1.bf16.msra.mxu0 %v615
    %771 = vmatprep.subr.bf16.mxu0 0
    %772 = vmatpush1.bf16.msra.mxu0 %v614
    %773 = vmatprep.subr.bf16.mxu0 0
    %774 = vmatpush1.bf16.msra.mxu0 %v613
    %775 = vmatprep.subr.bf16.mxu0 0
    %776 = vmatpush1.bf16.msra.mxu0 %v612
    %777 = vmatprep.subr.bf16.mxu0 0
    %778 = vmatpush1.bf16.msra.mxu0 %v611
    %779 = vmatprep.subr.bf16.mxu0 0
    %780 = vmatpush2.bf16.msra.mxu0 %v626
    %781 = vmatprep.subr.bf16.mxu0 0
    %782 = vmatpush2.bf16.msra.mxu0 %v625
    %783 = vmatprep.subr.bf16.mxu0 0
    %784 = vmatpush2.bf16.msra.mxu0 %v624
    %785 = vmatprep.subr.bf16.mxu0 0
    %786 = vmatpush2.bf16.msra.mxu0 %v623
    %787 = vmatprep.subr.bf16.mxu0 0
    %788 = vmatpush2.bf16.msra.mxu0 %v622
    %789 = vmatprep.subr.bf16.mxu0 0
    %790 = vmatpush2.bf16.msra.mxu0 %v621
    %791 = vmatprep.subr.bf16.mxu0 0
    %792 = vmatpush2.bf16.msra.mxu0 %v620
    %793 = vmatprep.subr.bf16.mxu0 0
    %794 = vmatpush2.bf16.msra.mxu0 %v619
    %795 = vmatprep.mubr.bf16.mxu0 %v276
    %796 = vmatmul.mubr.bf16.gmra.mxu0 %v275
    %v797 = vpop.f32.mrf.mxu0
    %v798 = vadd.f32 %v757, %v797
    %v799 = vpop.f32.mrf.mxu0
    %v800 = vpop.f32.mrf.mxu0
    %v801 = vadd.f32 %v760, %v800
    %v802 = vpop.f32.mrf.mxu0
    %803 = vdwg.mxu0
    %804 = vmatprep.subr.bf16.mxu0 0
    %805 = vmatpush1.bf16.msra.mxu0 0
    %806 = vmatprep.subr.bf16.mxu0 0
    %807 = vmatpush1.bf16.msra.mxu0 0
    %808 = vmatprep.subr.bf16.mxu0 0
    %809 = vmatpush1.bf16.msra.mxu0 0
    %810 = vmatprep.subr.bf16.mxu0 0
    %811 = vmatpush1.bf16.msra.mxu0 0
    %812 = vmatprep.subr.bf16.mxu0 0
    %813 = vmatpush1.bf16.msra.mxu0 0
    %814 = vmatprep.subr.bf16.mxu0 0
    %815 = vmatpush1.bf16.msra.mxu0 0
    %816 = vmatprep.subr.bf16.mxu0 0
    %817 = vmatpush1.bf16.msra.mxu0 0
    %818 = vmatprep.subr.bf16.mxu0 0
    %819 = vmatpush1.bf16.msra.mxu0 %v627
    %820 = vmatprep.subr.bf16.mxu0 0
    %821 = vmatpush2.bf16.msra.mxu0 0
    %822 = vmatprep.subr.bf16.mxu0 0
    %823 = vmatpush2.bf16.msra.mxu0 0
    %824 = vmatprep.subr.bf16.mxu0 0
    %825 = vmatpush2.bf16.msra.mxu0 0
    %826 = vmatprep.subr.bf16.mxu0 0
    %827 = vmatpush2.bf16.msra.mxu0 0
    %828 = vmatprep.subr.bf16.mxu0 0
    %829 = vmatpush2.bf16.msra.mxu0 0
    %830 = vmatprep.subr.bf16.mxu0 0
    %831 = vmatpush2.bf16.msra.mxu0 0
    %832 = vmatprep.subr.bf16.mxu0 0
    %833 = vmatpush2.bf16.msra.mxu0 0
    %834 = vmatprep.subr.bf16.mxu0 0
    %835 = vmatpush2.bf16.msra.mxu0 0
    %836 = vmatprep.mubr.bf16.mxu0 0
    %837 = vmatmul.mubr.bf16.gmra.mxu0 %v679
    %v838 = vpop.f32.mrf.mxu0
    %v839 = vadd.f32 %v798, %v838
    %v840 = vpop.f32.mrf.mxu0
    %v841 = vpop.f32.mrf.mxu0
    %v842 = vadd.f32 %v801, %v841
    %v843 = vpop.f32.mrf.mxu0
    %844 = vdwg.mxu0
    %v845 = vmax.f32 %v839, 0.0
    %v846 = vmax.f32 %v842, 0.0
    %v847 = vpack.c.bf16 %v846, %v845
    %v848 = vld [vmem:[#allocation7] sm:$0xf]
    %v849 = vld [vmem:[#allocation7 + $0x4] sm:$0xf]
    %v850 = vld [vmem:[#allocation7 + $0x8] sm:$0xf]
    %v851 = vld [vmem:[#allocation7 + $0xc] sm:$0xf]
    %v852 = vld [vmem:[#allocation7 + $0x10] sm:$0xf]
    %v853 = vld [vmem:[#allocation7 + $0x14] sm:$0xf]
    %v854 = vld [vmem:[#allocation7 + $0x18] sm:$0xf]
    %v855 = vld [vmem:[#allocation7 + $0x1c] sm:$0xf]
    %v856 = vld [vmem:[#allocation7 + $0x20] sm:$0xf]
    %v857 = vld [vmem:[#allocation7 + $0x24] sm:$0xf]
    %v858 = vld [vmem:[#allocation7 + $0x28] sm:$0xf]
    %v859 = vld [vmem:[#allocation7 + $0x2c] sm:$0xf]
    %v860 = vld [vmem:[#allocation7 + $0x30] sm:$0xf]
    %v861 = vld [vmem:[#allocation7 + $0x34] sm:$0xf]
    %v862 = vld [vmem:[#allocation7 + $0x38] sm:$0xf]
    %v863 = vld [vmem:[#allocation7 + $0x3c] sm:$0xf]
    %v864 = vld [vmem:[%s4] sm:$0x1]
    %v866 = vlaneseq
    %v867 = vshrl.u32 %v866, 7
    %v868 = vsub.s32 0, %v867
    %v869 = vrot.slane %v864, %v868
    %v887 = vunpack.c.l.b16 %v848
    %v888 = vunpack.c.l.b16 %v849
    %v889 = vunpack.c.l.b16 %v850
    %v890 = vunpack.c.l.b16 %v851
    %v891 = vunpack.c.l.b16 %v852
    %v892 = vunpack.c.l.b16 %v853
    %v893 = vunpack.c.l.b16 %v854
    %v894 = vunpack.c.l.b16 %v855
    %v895 = vunpack.c.l.b16 %v856
    %v896 = vunpack.c.l.b16 %v857
    %v897 = vunpack.c.l.b16 %v858
    %v898 = vunpack.c.l.b16 %v859
    %v899 = vunpack.c.l.b16 %v860
    %v900 = vunpack.c.l.b16 %v861
    %v901 = vunpack.c.l.b16 %v862
    %v902 = vunpack.c.l.b16 %v863
    %v903 = vpack.c.b16 %v888, %v887
    %v904 = vpack.c.b16 %v890, %v889
    %v905 = vpack.c.b16 %v892, %v891
    %v906 = vpack.c.b16 %v894, %v893
    %v907 = vpack.c.b16 %v896, %v895
    %v908 = vpack.c.b16 %v898, %v897
    %v909 = vpack.c.b16 %v900, %v899
    %v910 = vpack.c.b16 %v902, %v901
    %919 = vmatprep.subr.bf16.mxu0 0
    %920 = vmatpush1.bf16.msra.mxu0 %v910
    %921 = vmatprep.subr.bf16.mxu0 0
    %922 = vmatpush1.bf16.msra.mxu0 %v909
    %923 = vmatprep.subr.bf16.mxu0 0
    %924 = vmatpush1.bf16.msra.mxu0 %v908
    %925 = vmatprep.subr.bf16.mxu0 0
    %926 = vmatpush1.bf16.msra.mxu0 %v907
    %927 = vmatprep.subr.bf16.mxu0 0
    %928 = vmatpush1.bf16.msra.mxu0 %v906
    %929 = vmatprep.subr.bf16.mxu0 0
    %930 = vmatpush1.bf16.msra.mxu0 %v905
    %931 = vmatprep.subr.bf16.mxu0 0
    %932 = vmatpush1.bf16.msra.mxu0 %v904
    %933 = vmatprep.subr.bf16.mxu0 0
    %934 = vmatpush1.bf16.msra.mxu0 %v903
    %935 = vmatprep.subr.bf16.mxu0 0
    %936 = vmatpush2.bf16.msra.mxu0 0
    %937 = vmatprep.subr.bf16.mxu0 0
    %938 = vmatpush2.bf16.msra.mxu0 0
    %939 = vmatprep.subr.bf16.mxu0 0
    %940 = vmatpush2.bf16.msra.mxu0 0
    %941 = vmatprep.subr.bf16.mxu0 0
    %942 = vmatpush2.bf16.msra.mxu0 0
    %943 = vmatprep.subr.bf16.mxu0 0
    %944 = vmatpush2.bf16.msra.mxu0 0
    %945 = vmatprep.subr.bf16.mxu0 0
    %946 = vmatpush2.bf16.msra.mxu0 0
    %947 = vmatprep.subr.bf16.mxu0 0
    %948 = vmatpush2.bf16.msra.mxu0 0
    %949 = vmatprep.subr.bf16.mxu0 0
    %950 = vmatpush2.bf16.msra.mxu0 0
    %951 = vmatprep.mubr.bf16.mxu0 0
    %952 = vmatmul.mubr.bf16.gmra.mxu0 %v847
    %v953 = vpop.f32.mrf.mxu0
    %v954 = vadd.f32 %v869, %v953
    %v955 = vpop.f32.mrf.mxu0
    %v956 = vpop.f32.mrf.mxu0
    %v957 = vadd.f32 %v869, %v956
    %v958 = vpop.f32.mrf.mxu0
    %959 = vdwg.mxu0
    %v960 = vmax.f32 %v954, 0.0
    %v961 = vmax.f32 %v957, 0.0
    %v962 = vpack.c.bf16 %v961, %v960
    %v963 = vld [vmem:[#allocation8] sm:$0xf]
    %v964 = vld [vmem:[#allocation8 + $0x4] sm:$0xf]
    %v965 = vld [vmem:[#allocation8 + $0x8] sm:$0xf]
    %v966 = vld [vmem:[#allocation8 + $0xc] sm:$0xf]
    %v967 = vld [vmem:[#allocation8 + $0x10] sm:$0xf]
    %v968 = vld [vmem:[#allocation8 + $0x14] sm:$0xf]
    %v969 = vld [vmem:[#allocation8 + $0x18] sm:$0xf]
    %v970 = vld [vmem:[#allocation8 + $0x1c] sm:$0xf]
    %v971 = vld [vmem:[#allocation8 + $0x20] sm:$0xf]
    %v972 = vld [vmem:[#allocation8 + $0x24] sm:$0xf]
    %v973 = vld [vmem:[#allocation8 + $0x28] sm:$0xf]
    %v974 = vld [vmem:[#allocation8 + $0x2c] sm:$0xf]
    %v975 = vld [vmem:[#allocation8 + $0x30] sm:$0xf]
    %v976 = vld [vmem:[#allocation8 + $0x34] sm:$0xf]
    %v977 = vld [vmem:[#allocation8 + $0x38] sm:$0xf]
    %v978 = vld [vmem:[#allocation8 + $0x3c] sm:$0xf]
    %v979 = vld [vmem:[%s6] sm:$0x1]
    %v981 = vlaneseq
    %v982 = vshrl.u32 %v981, 7
    %v983 = vsub.s32 0, %v982
    %v984 = vrot.slane %v979, %v983
    %v1002 = vunpack.c.l.b16 %v963
    %v1003 = vunpack.c.l.b16 %v964
    %v1004 = vunpack.c.l.b16 %v965
    %v1005 = vunpack.c.l.b16 %v966
    %v1006 = vunpack.c.l.b16 %v967
    %v1007 = vunpack.c.l.b16 %v968
    %v1008 = vunpack.c.l.b16 %v969
    %v1009 = vunpack.c.l.b16 %v970
    %v1010 = vunpack.c.l.b16 %v971
    %v1011 = vunpack.c.l.b16 %v972
    %v1012 = vunpack.c.l.b16 %v973
    %v1013 = vunpack.c.l.b16 %v974
    %v1014 = vunpack.c.l.b16 %v975
    %v1015 = vunpack.c.l.b16 %v976
    %v1016 = vunpack.c.l.b16 %v977
    %v1017 = vunpack.c.l.b16 %v978
    %v1018 = vpack.c.b16 %v1003, %v1002
    %v1019 = vpack.c.b16 %v1005, %v1004
    %v1020 = vpack.c.b16 %v1007, %v1006
    %v1021 = vpack.c.b16 %v1009, %v1008
    %v1022 = vpack.c.b16 %v1011, %v1010
    %v1023 = vpack.c.b16 %v1013, %v1012
    %v1024 = vpack.c.b16 %v1015, %v1014
    %v1025 = vpack.c.b16 %v1017, %v1016
    %1034 = vmatprep.subr.bf16.mxu0 0
    %1035 = vmatpush1.bf16.msra.mxu0 %v1025
    %1036 = vmatprep.subr.bf16.mxu0 0
    %1037 = vmatpush1.bf16.msra.mxu0 %v1024
    %1038 = vmatprep.subr.bf16.mxu0 0
    %1039 = vmatpush1.bf16.msra.mxu0 %v1023
    %1040 = vmatprep.subr.bf16.mxu0 0
    %1041 = vmatpush1.bf16.msra.mxu0 %v1022
    %1042 = vmatprep.subr.bf16.mxu0 0
    %1043 = vmatpush1.bf16.msra.mxu0 %v1021
    %1044 = vmatprep.subr.bf16.mxu0 0
    %1045 = vmatpush1.bf16.msra.mxu0 %v1020
    %1046 = vmatprep.subr.bf16.mxu0 0
    %1047 = vmatpush1.bf16.msra.mxu0 %v1019
    %1048 = vmatprep.subr.bf16.mxu0 0
    %1049 = vmatpush1.bf16.msra.mxu0 %v1018
    %1050 = vmatprep.subr.bf16.mxu0 0
    %1051 = vmatpush2.bf16.msra.mxu0 0
    %1052 = vmatprep.subr.bf16.mxu0 0
    %1053 = vmatpush2.bf16.msra.mxu0 0
    %1054 = vmatprep.subr.bf16.mxu0 0
    %1055 = vmatpush2.bf16.msra.mxu0 0
    %1056 = vmatprep.subr.bf16.mxu0 0
    %1057 = vmatpush2.bf16.msra.mxu0 0
    %1058 = vmatprep.subr.bf16.mxu0 0
    %1059 = vmatpush2.bf16.msra.mxu0 0
    %1060 = vmatprep.subr.bf16.mxu0 0
    %1061 = vmatpush2.bf16.msra.mxu0 0
    %1062 = vmatprep.subr.bf16.mxu0 0
    %1063 = vmatpush2.bf16.msra.mxu0 0
    %1064 = vmatprep.subr.bf16.mxu0 0
    %1065 = vmatpush2.bf16.msra.mxu0 0
    %1066 = vmatprep.mubr.bf16.mxu0 0
    %1067 = vmatmul.mubr.bf16.gmra.mxu0 %v962
    %v1068 = vpop.f32.mrf.mxu0
    %v1069 = vadd.f32 %v984, %v1068
    %v1070 = vpop.f32.mrf.mxu0
    %v1071 = vpop.f32.mrf.mxu0
    %v1072 = vadd.f32 %v984, %v1071
    %v1073 = vpop.f32.mrf.mxu0
    %1074 = vdwg.mxu0
    %v1075 = vpack.c.bf16 %v1072, %v1069
    %v1077 = vcombine.high %v1075, %v1075
    %v1079 = vunpack.c.l.s4 1966171168
    %v1080 = vunpack.c.0.s8 %v1079
    %v1081 = vlaneseq
    %v1082 = vshrl.u32 %v1081, 7
    %v1083 = vsub.s32 %v1080, %v1082
    %v1084 = vrot.slane %v1075, %v1083
    %v1086 = vunpack.c.l.s4 1966171168
    %v1087 = vunpack.c.0.s8 %v1086
    %v1088 = vlaneseq
    %v1089 = vshrl.u32 %v1088, 7
    %v1090 = vsub.s32 %v1087, %v1089
    %v1091 = vrot.slane %v1077, %v1090
    %v1092 = vcombine.high %v1084, %v1084
    %v1093 = vcombine.high %v1091, %v1091
    %v1095 = vunpack.c.l.s4 1966171168
    %v1096 = vunpack.c.0.s8 %v1095
    %v1097 = vlaneseq
    %v1098 = vshrl.u32 %v1097, 7
    %v1099 = vsub.s32 %v1096, %v1098
    %v1100 = vrot.slane %v1084, %v1099
    %v1102 = vunpack.c.l.s4 1966171168
    %v1103 = vunpack.c.0.s8 %v1102
    %v1104 = vlaneseq
    %v1105 = vshrl.u32 %v1104, 7
    %v1106 = vsub.s32 %v1103, %v1105
    %v1107 = vrot.slane %v1091, %v1106
    %v1109 = vunpack.c.l.s4 1966171168
    %v1110 = vunpack.c.0.s8 %v1109
    %v1111 = vlaneseq
    %v1112 = vshrl.u32 %v1111, 7
    %v1113 = vsub.s32 %v1110, %v1112
    %v1114 = vrot.slane %v1092, %v1113
    %v1116 = vunpack.c.l.s4 1966171168
    %v1117 = vunpack.c.0.s8 %v1116
    %v1118 = vlaneseq
    %v1119 = vshrl.u32 %v1118, 7
    %v1120 = vsub.s32 %v1117, %v1119
    %v1121 = vrot.slane %v1093, %v1120
    %v1122 = vcombine.high %v1100, %v1100
    %v1123 = vcombine.high %v1107, %v1107
    %v1124 = vcombine.high %v1114, %v1114
    %v1125 = vcombine.high %v1121, %v1121
    %1134 = vst [vmem:[#allocation10] sm:$0x1] %v1100
    %1135 = vst [vmem:[#allocation10 + $0x1] sm:$0x1] %v1114
    %1136 = vst [vmem:[#allocation10 + $0x2] sm:$0x1] %v1122
    %1137 = vst [vmem:[#allocation10 + $0x3] sm:$0x1] %v1124
    %1138 = vst [vmem:[#allocation10 + $0x4] sm:$0x1] %v1107
    %1139 = vst [vmem:[#allocation10 + $0x5] sm:$0x1] %v1121
    %1140 = vst [vmem:[#allocation10 + $0x6] sm:$0x1] %v1123
    %1141 = vst [vmem:[#allocation10 + $0x7] sm:$0x1] %v1125
    // Predicated region
    $region46: #{tpu_custom_call.1} parent=1 // pred_check
      _
    $region47: #{tpu_custom_call.1} parent=1 // pred_check_branch
      %1143 = sbr.rel (0) target = $region49
    $region48: #{tpu_custom_call.1} parent=1 // pred_region
      %s1145 = ssub.s32 128, 16
      %1146 = vsyncadd [#allocation4], %s1145
      %s1147 = sshll.u32 [#allocation10], 4
      %s1148 = int_to_ptr.vmem [resolvable:$true] %s1147
      %1153 = dma.vmem_to_hbm [thread:$0]  %s1148, 16, %s7, [#allocation4], 16, 16, 1
    $region49: #{tpu_custom_call.1} parent=1 // pred_fallthru
      _
    // Predicated region
    $region50: #{tpu_custom_call.1} parent=1 // pred_check
      _
    $region51: #{tpu_custom_call.1} parent=1 // pred_check_branch
      %1155 = sbr.rel (0) target = $region53
    $region52: #{tpu_custom_call.1} parent=1 // pred_region
      %1156 = dma.done [#allocation4], 128
    $region53: #{tpu_custom_call.1} parent=1 // pred_fallthru
      _
    %1157 = vsyncpa [#allocation3], 1
    %1158 = vsyncpa [#allocation6], 1
    %1159 = vsyncpa [#allocation9], 1
    %1160 = vsyncpa [#allocation4], 1

</llo_original>
